<compile_context>
chip_gen: v7x
topology: tpu7x:2x2x1
jax: 0.10.0
libtpu: 0.0.40
codegen_flags: <defaults>
</compile_context>

<pallas_src>
import jax
import jax.numpy as jnp
from jax import lax
from jax.experimental import pallas as pl
from jax.experimental.pallas import tpu as pltpu

# ---------------- model dimensions (small, synthetic) ----------------
B = 2                  # batch
T = 1024               # prompt-speech samples per item
F_IN = 64              # samples per analysis frame
N_FRAMES = T // F_IN   # 16
H = 128                # hidden / speaker-embedding dim
S = 8                  # generated frame steps ("text" length)
F_OUT = 64             # output waveform samples per generated step
VOCAB = 32             # synthetic token vocabulary (prompt text)
N_LANG = 4             # synthetic language tags (<|lang|>)

# f32 constant-slab row layout (all rows H=128 lanes wide)
ROW_TOK = 0                  # rows [0, 32)  : token embedding table
ROW_LANG = VOCAB             # rows [32, 36) : language embedding table
ROW_BSPK = VOCAB + N_LANG    # 36            : speaker-encoder bias
ROW_B1 = ROW_BSPK + 1        # 37            : decoder hidden bias
ROW_B2 = ROW_B1 + 1          # 38            : decoder output bias (lane-padded)
C_ROWS = 40                  # padded to a sublane multiple

# bf16 weight-slab row layout (128 lanes wide)
W_ROWS = F_IN + H + H        # 320 : w_spk (64) | w1 (128) | w2 lane-padded (128)

# TODO(synk): real CosyVoice2 (pretrained LLM + flow matching + HiFiGAN,
# load_wav / torchaudio.save file I/O, streaming generator loop) has no Pallas
# equivalent; this script implements the deterministic numeric core only.


# ---------------- fused Pallas kernel ----------------
def cosyvoice_fused_kernel(frames_ref, ids_ref, cslab_ref, wslab_ref, o_ref):
    # ---- speaker encoder (== add_zero_shot_spk) -------------------------
    # frames_ref: (B*N_FRAMES, F_IN) -> one MXU matmul, batch folded into M.
    cslab = cslab_ref[...]                                   # (40, 128) f32, loaded once
    w_spk = wslab_ref[0:F_IN, :]                             # (64, 128) bf16
    h = jnp.dot(frames_ref[...].astype(jnp.bfloat16), w_spk,
                preferred_element_type=jnp.float32)
    h = jnp.maximum(h + cslab[ROW_BSPK:ROW_BSPK + 1, :], 0.0)   # (32, 128) f32
    spk = jnp.mean(h.reshape(B, N_FRAMES, H), axis=1)        # (2, 128) mean over frames

    # ---- token + language embedding gather as ONE one-hot MXU matmul -----
    # ids_ref: (B*S, 2) int32; col 0 = token id (< VOCAB), col 1 = VOCAB+lang_id.
    ids = ids_ref[...]
    iota = lax.broadcasted_iota(jnp.int32, (B * S, C_ROWS), 1)
    onehot = ((iota == ids[:, 0:1]).astype(jnp.float32)
              + (iota == ids[:, 1:2]).astype(jnp.float32))   # (16, 40), bias rows never hit
    e = jnp.dot(onehot, cslab, preferred_element_type=jnp.float32)  # (16, 128) exact gather

    # ---- conditioned decoder (== inference_cross_lingual -> tts_speech) --
    spk_bs = jnp.broadcast_to(spk[:, None, :], (B, S, H)).reshape(B * S, H)
    w1 = wslab_ref[F_IN:F_IN + H, :]                          # (128, 128) bf16
    h1 = jnp.tanh(
        jnp.dot(e.astype(jnp.bfloat16), w1, preferred_element_type=jnp.float32)
        + cslab[ROW_B1:ROW_B1 + 1, :] + spk_bs)               # (16, 128) f32
    w2p = wslab_ref[F_IN + H:F_IN + 2 * H, :]                 # (128, 128) bf16, cols>=F_OUT zero
    y = jnp.dot(h1.astype(jnp.bfloat16), w2p,
                preferred_element_type=jnp.float32)           # (16, 128)
    y = y[:, 0:F_OUT] + cslab[ROW_B2:ROW_B2 + 1, 0:F_OUT]     # (16, 64)

    # ---- single full-ref store (no per-step masked stores) ---------------
    o_ref[...] = jnp.tanh(y)                                  # waveform in [-1, 1]


# ---------------- wrapper ----------------
def _fused_tts(frames, ids, cslab, wslab):
    cost = pl.CostEstimate(flops=1_736_704,          # 4 MXU matmuls
                           transcendentals=3_072,    # tanh
                           bytes_accessed=114_816)
    return pl.pallas_call(
        cosyvoice_fused_kernel,
        out_shape=jax.ShapeDtypeStruct((B * S, F_OUT), jnp.float32),
        grid_spec=pltpu.PrefetchScalarGridSpec(
            num_scalar_prefetch=0,
            grid=(1,),                               # single grid point
            in_specs=[
                pl.BlockSpec((B * N_FRAMES, F_IN), lambda i: (0, 0)),   # frames
                pl.BlockSpec((B * S, 2),           lambda i: (0, 0)),   # ids
                pl.BlockSpec((C_ROWS, H),          lambda i: (0, 0)),   # f32 const slab
                pl.BlockSpec((W_ROWS, H),          lambda i: (0, 0)),   # bf16 weight slab
            ],
            out_specs=pl.BlockSpec((B * S, F_OUT), lambda i: (0, 0)),
        ),
        compiler_params=pltpu.CompilerParams(dimension_semantics=("arbitrary",)),
        cost_estimate=cost,
    )(frames, ids, cslab, wslab)


@jax.jit
def cosyvoice_tts_forward(x_wave, prompt_tokens, lang_id, params):
    """x_wave: [B, T] float32 prompt speech (stands in for load_wav(x, 16k)).
    prompt_tokens: [B, S] int32 (stands in for the prompt text).
    lang_id: int32 scalar (stands in for the <|lang|> tag).
    Returns tts_speech: [B, S * F_OUT]."""
    # frame the prompt speech into features (batch folded into matmul M dim)
    frames = x_wave.reshape(B * N_FRAMES, F_IN)
    # token id in col 0, offset language index (into the fused table) in col 1
    lang_col = (ROW_LANG + jnp.asarray(lang_id, jnp.int32)).reshape(1, 1)
    ids = jnp.concatenate(
        [prompt_tokens.reshape(B * S, 1).astype(jnp.int32),
         jnp.broadcast_to(lang_col, (B * S, 1))], axis=1)
    # single fused Pallas call: speaker encoder + one-hot embedding gather + decoder
    out = _fused_tts(frames, ids, params["cslab"], params["wslab"])   # (B*S, F_OUT)
    # row-major contiguous reshape -> lane-dense waveform slab per utterance
    tts_speech = out.reshape(B, S * F_OUT)
    # TODO(synk): torchaudio.save of the result to output_dir is I/O, not implemented.
    return tts_speech


def init_params(key):
    ks = jax.random.split(key, 8)
    scale = 0.05
    # ---- f32 constant slab: tok_table | lang_table | b_spk | b1 | b2 | pad ----
    tok_table = scale * jax.random.normal(ks[0], (VOCAB, H), jnp.float32)
    lang_table = scale * jax.random.normal(ks[1], (N_LANG, H), jnp.float32)
    b_spk = 0.01 * jax.random.normal(ks[2], (1, H), jnp.float32)
    b1 = 0.01 * jax.random.normal(ks[3], (1, H), jnp.float32)
    b2 = 0.01 * jax.random.normal(ks[4], (1, F_OUT), jnp.float32)
    b2_pad = jnp.pad(b2, ((0, 0), (0, H - F_OUT)))
    pad_row = jnp.zeros((C_ROWS - (ROW_B2 + 1), H), jnp.float32)
    cslab = jnp.concatenate([tok_table, lang_table, b_spk, b1, b2_pad, pad_row],
                            axis=0)                                   # (40, 128) f32
    # ---- bf16 weight slab: w_spk | w1 | w2 (lane-padded to 128) ----
    w_spk = (scale * jax.random.normal(ks[5], (F_IN, H), jnp.float32)
             ).astype(jnp.bfloat16)
    w1 = (scale * jax.random.normal(ks[6], (H, H), jnp.float32)
          ).astype(jnp.bfloat16)
    w2 = (scale * jax.random.normal(ks[7], (H, F_OUT), jnp.float32)
          ).astype(jnp.bfloat16)
    w2_pad = jnp.pad(w2, ((0, 0), (0, H - F_OUT)))
    wslab = jnp.concatenate([w_spk, w1, w2_pad], axis=0)              # (320, 128) bf16
    return {"cslab": cslab, "wslab": wslab}


if __name__ == "__main__":
    key = jax.random.PRNGKey(0)
    k_wave, k_tok, k_par = jax.random.split(key, 3)

    x_wave = jax.random.normal(k_wave, (B, T), jnp.float32)               # prompt speech
    prompt_tokens = jax.random.randint(k_tok, (B, S), 0, VOCAB, jnp.int32)
    lang_id = jnp.int32(1)                                                # e.g. <|en|>
    params = init_params(k_par)

    tts_speech = cosyvoice_tts_forward(x_wave, prompt_tokens, lang_id, params)
    tts_speech = jax.block_until_ready(tts_speech)

    assert tts_speech.shape == (B, S * F_OUT)
    assert bool(jnp.all(jnp.isfinite(tts_speech)))
    print("KERNEL_OK")
</pallas_src>

<mosaic_0001>
module attributes {stable_mosaic.version = 11 : i64} {
  func.func @cosyvoice_fused_kernel(%arg0: i32, %arg1: memref<32x64xf32, #tpu.memory_space<vmem>>, %arg2: memref<16x2xi32, #tpu.memory_space<vmem>>, %arg3: memref<40x128xf32, #tpu.memory_space<vmem>>, %arg4: memref<320x128xbf16, #tpu.memory_space<vmem>>, %arg5: memref<16x64xf32, #tpu.memory_space<vmem>>) attributes {dimension_semantics = [#tpu.dimension_semantics<arbitrary>], iteration_bounds = array<i64: 1>, scalar_prefetch = 0 : i64, scratch_operands = 0 : i64, tpu.core_type = #tpu.core_type<tc>, window_params = [{pipeline_mode = #tpu.pipeline_mode<synchronous>, transform_indices = @transform_0, window_bounds = array<i64: 32, 64>}, {pipeline_mode = #tpu.pipeline_mode<synchronous>, transform_indices = @transform_1, window_bounds = array<i64: 16, 2>}, {pipeline_mode = #tpu.pipeline_mode<synchronous>, transform_indices = @transform_2, window_bounds = array<i64: 40, 128>}, {pipeline_mode = #tpu.pipeline_mode<synchronous>, transform_indices = @transform_3, window_bounds = array<i64: 320, 128>}, {pipeline_mode = #tpu.pipeline_mode<synchronous>, transform_indices = @transform_4, window_bounds = array<i64: 16, 64>}]} {
    %c0 = arith.constant 0 : index
    %c0_0 = arith.constant 0 : index
    %0 = vector.load %arg3[%c0, %c0_0] : memref<40x128xf32, #tpu.memory_space<vmem>>, vector<40x128xf32>
    %c0_1 = arith.constant 0 : index
    %c0_2 = arith.constant 0 : index
    %1 = vector.load %arg4[%c0_1, %c0_2] : memref<320x128xbf16, #tpu.memory_space<vmem>>, vector<64x128xbf16>
    %c0_3 = arith.constant 0 : index
    %c0_4 = arith.constant 0 : index
    %2 = vector.load %arg1[%c0_3, %c0_4] : memref<32x64xf32, #tpu.memory_space<vmem>>, vector<32x64xf32>
    %3 = arith.truncf %2 : vector<32x64xf32> to vector<32x64xbf16>
    %cst = arith.constant dense<0.000000e+00> : vector<32x128xf32>
    %4 = tpu.matmul %3, %1, %cst {dimension_numbers = #tpu.dot_dimension_numbers<[1], [0], [0], [1], [0, 0, 1, 1], [], []>} : vector<32x64xbf16>, vector<64x128xbf16>, vector<32x128xf32> -> vector<32x128xf32>
    %5 = vector.extract_strided_slice %0 {offsets = [36, 0], sizes = [1, 128], strides = [1, 1]} : vector<40x128xf32> to vector<1x128xf32>
    %6 = vector.broadcast %5 : vector<1x128xf32> to vector<32x128xf32>
    %7 = arith.addf %4, %6 : vector<32x128xf32>
    %cst_5 = arith.constant 0.000000e+00 : f32
    %8 = vector.broadcast %cst_5 : f32 to vector<32x128xf32>
    %9 = arith.maximumf %7, %8 : vector<32x128xf32>
    %10 = vector.shape_cast %9 : vector<32x128xf32> to vector<2x16x128xf32>
    %cst_6 = arith.constant dense<0.000000e+00> : vector<2x128xf32>
    %11 = vector.multi_reduction <add>, %10, %cst_6 [1] : vector<2x16x128xf32> to vector<2x128xf32>
    %cst_7 = arith.constant 1.600000e+01 : f32
    %12 = vector.broadcast %cst_7 : f32 to vector<2x128xf32>
    %13 = arith.divf %11, %12 : vector<2x128xf32>
    %c0_8 = arith.constant 0 : index
    %c0_9 = arith.constant 0 : index
    %14 = vector.load %arg2[%c0_8, %c0_9] : memref<16x2xi32, #tpu.memory_space<vmem>>, vector<16x2xi32>
    %15 = tpu.iota {dimensions = array<i32: 1>} : vector<16x40xi32>
    %16 = vector.extract_strided_slice %14 {offsets = [0, 0], sizes = [16, 1], strides = [1, 1]} : vector<16x2xi32> to vector<16x1xi32>
    %17 = vector.broadcast %16 : vector<16x1xi32> to vector<16x40xi32>
    %18 = arith.cmpi eq, %15, %17 : vector<16x40xi32>
    %19 = arith.extui %18 : vector<16x40xi1> to vector<16x40xi32>
    %20 = arith.sitofp %19 : vector<16x40xi32> to vector<16x40xf32>
    %21 = vector.extract_strided_slice %14 {offsets = [0, 1], sizes = [16, 1], strides = [1, 1]} : vector<16x2xi32> to vector<16x1xi32>
    %22 = vector.broadcast %21 : vector<16x1xi32> to vector<16x40xi32>
    %23 = arith.cmpi eq, %15, %22 : vector<16x40xi32>
    %24 = arith.extui %23 : vector<16x40xi1> to vector<16x40xi32>
    %25 = arith.sitofp %24 : vector<16x40xi32> to vector<16x40xf32>
    %26 = arith.addf %20, %25 : vector<16x40xf32>
    %cst_10 = arith.constant dense<0.000000e+00> : vector<16x128xf32>
    %27 = tpu.matmul %26, %0, %cst_10 {dimension_numbers = #tpu.dot_dimension_numbers<[1], [0], [0], [1], [0, 0, 1, 1], [], []>} : vector<16x40xf32>, vector<40x128xf32>, vector<16x128xf32> -> vector<16x128xf32>
    %28 = vector.shape_cast %13 : vector<2x128xf32> to vector<2x1x128xf32>
    %29 = vector.shape_cast %28 : vector<2x1x128xf32> to vector<2x1x128xf32>
    %30 = vector.broadcast %29 : vector<2x1x128xf32> to vector<2x8x128xf32>
    %31 = vector.shape_cast %30 : vector<2x8x128xf32> to vector<16x128xf32>
    %c64 = arith.constant 64 : index
    %c0_11 = arith.constant 0 : index
    %32 = vector.load %arg4[%c64, %c0_11] : memref<320x128xbf16, #tpu.memory_space<vmem>>, vector<128x128xbf16>
    %33 = arith.truncf %27 : vector<16x128xf32> to vector<16x128xbf16>
    %cst_12 = arith.constant dense<0.000000e+00> : vector<16x128xf32>
    %34 = tpu.matmul %33, %32, %cst_12 {dimension_numbers = #tpu.dot_dimension_numbers<[1], [0], [0], [1], [0, 0, 1, 1], [], []>} : vector<16x128xbf16>, vector<128x128xbf16>, vector<16x128xf32> -> vector<16x128xf32>
    %35 = vector.extract_strided_slice %0 {offsets = [37, 0], sizes = [1, 128], strides = [1, 1]} : vector<40x128xf32> to vector<1x128xf32>
    %36 = vector.broadcast %35 : vector<1x128xf32> to vector<16x128xf32>
    %37 = arith.addf %34, %36 : vector<16x128xf32>
    %38 = arith.addf %37, %31 : vector<16x128xf32>
    %39 = math.tanh %38 : vector<16x128xf32>
    %c192 = arith.constant 192 : index
    %c0_13 = arith.constant 0 : index
    %40 = vector.load %arg4[%c192, %c0_13] : memref<320x128xbf16, #tpu.memory_space<vmem>>, vector<128x128xbf16>
    %41 = arith.truncf %39 : vector<16x128xf32> to vector<16x128xbf16>
    %cst_14 = arith.constant dense<0.000000e+00> : vector<16x128xf32>
    %42 = tpu.matmul %41, %40, %cst_14 {dimension_numbers = #tpu.dot_dimension_numbers<[1], [0], [0], [1], [0, 0, 1, 1], [], []>} : vector<16x128xbf16>, vector<128x128xbf16>, vector<16x128xf32> -> vector<16x128xf32>
    %43 = vector.extract_strided_slice %42 {offsets = [0, 0], sizes = [16, 64], strides = [1, 1]} : vector<16x128xf32> to vector<16x64xf32>
    %44 = vector.extract_strided_slice %0 {offsets = [38, 0], sizes = [1, 64], strides = [1, 1]} : vector<40x128xf32> to vector<1x64xf32>
    %45 = vector.broadcast %44 : vector<1x64xf32> to vector<16x64xf32>
    %46 = arith.addf %43, %45 : vector<16x64xf32>
    %47 = math.tanh %46 : vector<16x64xf32>
    %c0_15 = arith.constant 0 : index
    %c0_16 = arith.constant 0 : index
    %48 = vector.load %arg5[%c0_15, %c0_16] : memref<16x64xf32, #tpu.memory_space<vmem>>, vector<16x64xf32>
    tpu.vector_store %arg5[%c0_15, %c0_16], %47 {strides = array<i32>} : memref<16x64xf32, #tpu.memory_space<vmem>>, vector<16x64xf32>,
    return
  }
  func.func @transform_0(%arg0: i32) -> (i32, i32) {
    %c0_i32 = arith.constant 0 : i32
    %c0_i32_0 = arith.constant 0 : i32
    %c0_i32_1 = arith.constant 0 : i32
    return %c0_i32, %c0_i32_0 : i32, i32
  }
  func.func @transform_1(%arg0: i32) -> (i32, i32) {
    %c0_i32 = arith.constant 0 : i32
    %c0_i32_0 = arith.constant 0 : i32
    %c0_i32_1 = arith.constant 0 : i32
    return %c0_i32, %c0_i32_0 : i32, i32
  }
  func.func @transform_2(%arg0: i32) -> (i32, i32) {
    %c0_i32 = arith.constant 0 : i32
    %c0_i32_0 = arith.constant 0 : i32
    %c0_i32_1 = arith.constant 0 : i32
    return %c0_i32, %c0_i32_0 : i32, i32
  }
  func.func @transform_3(%arg0: i32) -> (i32, i32) {
    %c0_i32 = arith.constant 0 : i32
    %c0_i32_0 = arith.constant 0 : i32
    %c0_i32_1 = arith.constant 0 : i32
    return %c0_i32, %c0_i32_0 : i32, i32
  }
  func.func @transform_4(%arg0: i32) -> (i32, i32) {
    %c0_i32 = arith.constant 0 : i32
    %c0_i32_0 = arith.constant 0 : i32
    %c0_i32_1 = arith.constant 0 : i32
    return %c0_i32, %c0_i32_0 : i32, i32
  }
}

</mosaic_0001>

<llo_original>
// kernel: cosyvoice_tts_forward.1
$region0: #{cosyvoice_tts_forward.1}
  #allocation0 [shape = 'u32[]', space=smem, size = 0x4, offset = 0x4, fixed_abs, tag = 'smem constant byte address 0x4 - core index']
  #allocation1 [shape = 'u32[144,128]{1,0:T(1,128)}', space=vmem, size = 0x12000, scoped, tag = 'internal scratch']
  %s0 = inlined_call_operand.vmem [shape: f32[32,64], index: 0, kind: input, shape index: {}]
  %s1 = inlined_call_operand.vmem [shape: s32[16,2], index: 1, kind: input, shape index: {}]
  %s2 = inlined_call_operand.vmem [shape: f32[40,128], index: 2, kind: input, shape index: {}]
  %s3 = inlined_call_operand.hbm [shape: bf16[320,128], index: 3, kind: input, shape index: {}]
  %s4 = inlined_call_operand.vmem [shape: f32[16,64], index: 4, kind: output, shape index: {}]
  %s5 = sld [smem:[#allocation0]]
  $region30: #{cosyvoice_tts_forward.1} parent=0
    _
  %s7 = ssub.s32 1, %s5
  %s8 = scalar_select 0, %s7, %s5
  $region1: #{cosyvoice_tts_forward.1} parent=0
    #allocation2 [shape = 'u8[81920]{0}', space=vmem, size = 0x14000, scoped, tag = 'input window, operand 3, single buffered']
    #allocation3 [shape = 's32[1]{0}', space=sflag, size = 0x4, scoped, tag = 'scoped memory for cosyvoice_tts_forward.1']
    %9 = vsyncpa [#allocation3], 0
    // Predicated region
    $region2: #{cosyvoice_tts_forward.1} parent=1 // pred_check
      _
    $region3: #{cosyvoice_tts_forward.1} parent=1 // pred_check_branch
      %11 = sbr.rel (0) target = $region5
    $region4: #{cosyvoice_tts_forward.1} parent=1 // pred_region
      _
    $region5: #{cosyvoice_tts_forward.1} parent=1 // pred_fallthru
      _
    // Predicated region
    $region6: #{cosyvoice_tts_forward.1} parent=1 // pred_check
      _
    $region7: #{cosyvoice_tts_forward.1} parent=1 // pred_check_branch
      %13 = sbr.rel (0) target = $region9
    $region8: #{cosyvoice_tts_forward.1} parent=1 // pred_region
      _
    $region9: #{cosyvoice_tts_forward.1} parent=1 // pred_fallthru
      _
    // Predicated region
    $region10: #{cosyvoice_tts_forward.1} parent=1 // pred_check
      _
    $region11: #{cosyvoice_tts_forward.1} parent=1 // pred_check_branch
      %15 = sbr.rel (0) target = $region13
    $region12: #{cosyvoice_tts_forward.1} parent=1 // pred_region
      _
    $region13: #{cosyvoice_tts_forward.1} parent=1 // pred_fallthru
      _
    // Predicated region
    $region14: #{cosyvoice_tts_forward.1} parent=1 // pred_check
      _
    $region15: #{cosyvoice_tts_forward.1} parent=1 // pred_check_branch
      %17 = sbr.rel (0) target = $region17
    $region16: #{cosyvoice_tts_forward.1} parent=1 // pred_region
      %s19 = ssub.s32 2560, 2560
      %20 = vsyncadd [#allocation3], %s19
      %s21 = sshll.u32 [#allocation2], 4
      %s22 = int_to_ptr.vmem [resolvable:$true] %s21
      %27 = dma.hbm_to_vmem [thread:$0]  %s3, 2560, %s22, [#allocation3], 64, 64, 4
    $region17: #{cosyvoice_tts_forward.1} parent=1 // pred_fallthru
      _
    // Predicated region
    $region18: #{cosyvoice_tts_forward.1} parent=1 // pred_check
      _
    $region19: #{cosyvoice_tts_forward.1} parent=1 // pred_check_branch
      %29 = sbr.rel (0) target = $region21
    $region20: #{cosyvoice_tts_forward.1} parent=1 // pred_region
      %30 = dma.done [#allocation3], 2560
    $region21: #{cosyvoice_tts_forward.1} parent=1 // pred_fallthru
      _
    %v32 = vld [vmem:[%s2] sm:$0xff]
    %v33 = vld [vmem:[%s2 + $0x8] sm:$0xff]
    %v34 = vld [vmem:[%s2 + $0x10] sm:$0xff]
    %v35 = vld [vmem:[%s2 + $0x18] sm:$0xff]
    %v36 = vld [vmem:[%s2 + $0x20] sm:$0xff]
    %v37 = vld [vmem:[#allocation2] sm:$0xf]
    %v38 = vld [vmem:[#allocation2 + $0x4] sm:$0xf]
    %v39 = vld [vmem:[#allocation2 + $0x8] sm:$0xf]
    %v40 = vld [vmem:[#allocation2 + $0xc] sm:$0xf]
    %v41 = vld [vmem:[#allocation2 + $0x10] sm:$0xf]
    %v42 = vld [vmem:[#allocation2 + $0x14] sm:$0xf]
    %v43 = vld [vmem:[#allocation2 + $0x18] sm:$0xf]
    %v44 = vld [vmem:[#allocation2 + $0x1c] sm:$0xf]
    %v45 = vld [vmem:[%s0] sm:$0xff]
    %v46 = vld [vmem:[%s0 + $0x8] sm:$0xff]
    %v47 = vld [vmem:[%s0 + $0x10] sm:$0xff]
    %v48 = vld [vmem:[%s0 + $0x18] sm:$0xff]
    %v49 = vpack.c.bf16 %v46, %v45
    %v50 = vpack.c.bf16 %v48, %v47
    %v51 = vlaneseq
    %v52 = vshrl.u32 %v51, 7
    %v53 = vsub.s32 4, %v52
    %v54 = vrot.slane %v36, %v53
    %v63 = vunpack.c.l.b16 %v37
    %v64 = vunpack.c.l.b16 %v38
    %v65 = vunpack.c.l.b16 %v39
    %v66 = vunpack.c.l.b16 %v40
    %v67 = vunpack.c.l.b16 %v41
    %v68 = vunpack.c.l.b16 %v42
    %v69 = vunpack.c.l.b16 %v43
    %v70 = vunpack.c.l.b16 %v44
    %v71 = vpack.c.b16 %v64, %v63
    %v72 = vpack.c.b16 %v66, %v65
    %v73 = vpack.c.b16 %v68, %v67
    %v74 = vpack.c.b16 %v70, %v69
    %vm79 = vcmask 523264
    %v81 = vsel %vm79, %v49, 0
    %v84 = vsel %vm79, %v50, 0
    %86 = vmatprep.subr.bf16.mxu0 0
    %87 = vmatpush1.bf16.msra.mxu0 %v71
    %88 = vmatprep.subr.bf16.mxu0 0
    %89 = vmatpush1.bf16.msra.mxu0 %v72
    %90 = vmatprep.subr.bf16.mxu0 0
    %91 = vmatpush1.bf16.msra.mxu0 %v73
    %92 = vmatprep.subr.bf16.mxu0 0
    %93 = vmatpush1.bf16.msra.mxu0 %v74
    %94 = vmatprep.subr.bf16.mxu0 0
    %95 = vmatpush1.bf16.msra.mxu0 0
    %96 = vmatprep.subr.bf16.mxu0 0
    %97 = vmatpush1.bf16.msra.mxu0 0
    %98 = vmatprep.subr.bf16.mxu0 0
    %99 = vmatpush1.bf16.msra.mxu0 0
    %100 = vmatprep.subr.bf16.mxu0 0
    %101 = vmatpush1.bf16.msra.mxu0 0
    %102 = vmatprep.subr.bf16.mxu0 0
    %103 = vmatpush1.bf16.msra.mxu0 0
    %104 = vmatprep.subr.bf16.mxu0 0
    %105 = vmatpush1.bf16.msra.mxu0 0
    %106 = vmatprep.subr.bf16.mxu0 0
    %107 = vmatpush1.bf16.msra.mxu0 0
    %108 = vmatprep.subr.bf16.mxu0 0
    %109 = vmatpush1.bf16.msra.mxu0 0
    %110 = vmatprep.subr.bf16.mxu0 0
    %111 = vmatpush1.bf16.msra.mxu0 0
    %112 = vmatprep.subr.bf16.mxu0 0
    %113 = vmatpush1.bf16.msra.mxu0 0
    %114 = vmatprep.subr.bf16.mxu0 0
    %115 = vmatpush1.bf16.msra.mxu0 0
    %116 = vmatprep.subr.bf16.mxu0 0
    %117 = vmatpush1.bf16.msra.mxu0 0
    %118 = vmatprep.mubr.bf16.mxu0 0
    %119 = vmatmul.mubr.bf16.gmra.mrb[0].mxu0 %v81
    %v120 = vpop.f32.mrb[0].mxu0
    %v121 = vadd.f32 %v54, %v120
    %v122 = vpop.f32.mrb[0].mxu0
    %v123 = vpop.f32.mrb[0].mxu0
    %v124 = vadd.f32 %v54, %v123
    %v125 = vpop.f32.mrb[0].mxu0
    %126 = vmatprep.mubr.bf16.mxu0 0
    %127 = vmatmul.mubr.bf16.gmra.mrb[0].mxu0 %v84
    %v128 = vpop.f32.mrb[0].mxu0
    %v129 = vadd.f32 %v54, %v128
    %v130 = vpop.f32.mrb[0].mxu0
    %v131 = vpop.f32.mrb[0].mxu0
    %v132 = vadd.f32 %v54, %v131
    %v133 = vpop.f32.mrb[0].mxu0
    %134 = vdwg.mxu0
    %v135 = vmax.f32 %v121, 0.0
    %v136 = vmax.f32 %v124, 0.0
    %v137 = vmax.f32 %v129, 0.0
    %v138 = vmax.f32 %v132, 0.0
    %v139 = vadd.f32 %v135, %v136
    %v140 = vrot.slane %v139, 4
    %v141 = vadd.f32 %v139, %v140
    %v142 = vrot.slane %v141, 2
    %v143 = vadd.f32 %v141, %v142
    %v144 = vrot.slane %v143, 1
    %v145 = vadd.f32 %v143, %v144
    %v146 = vadd.f32 %v137, %v138
    %v147 = vrot.slane %v146, 4
    %v148 = vadd.f32 %v146, %v147
    %v149 = vrot.slane %v148, 2
    %v150 = vadd.f32 %v148, %v149
    %v151 = vrot.slane %v150, 1
    %v152 = vadd.f32 %v150, %v151
    %v153 = vrcp.pop 16.0
    %v154 = vmul.f32 %v145, %v153
    %v155 = vmul.f32 %v152, %v153
    %v156 = vld [vmem:[%s1] sm:$0xff]
    %v157 = vld [vmem:[%s1 + $0x8] sm:$0xff]
    %v158 = vlaneseq
    %v159 = vand.u32 %v158, 127
    %160 = vset.pattern.permute.xlu0 0
    %161 = vperm.xlu0 %160, %v156
    %v162 = vpop.permute.xlu0 %161
    %163 = vset.pattern.permute.xlu0 0
    %164 = vperm.xlu0 %163, %v157
    %v165 = vpop.permute.xlu0 %164
    %vm166 = vcmp.eq.s32.totalorder %v159, %v162
    %vm167 = vcmp.eq.s32.totalorder %v159, %v165
    %v168 = vsel %vm166, 1, 0
    %v169 = vsel %vm167, 1, 0
    %v170 = vcvt.s32.f32 %v168
    %v171 = vcvt.s32.f32 %v169
    %172 = vset.pattern.permute.xlu0 1
    %173 = vperm.xlu0 %172, %v156
    %v174 = vpop.permute.xlu0 %173
    %175 = vset.pattern.permute.xlu0 1
    %176 = vperm.xlu0 %175, %v157
    %v177 = vpop.permute.xlu0 %176
    %vm178 = vcmp.eq.s32.totalorder %v159, %v174
    %vm179 = vcmp.eq.s32.totalorder %v159, %v177
    %v180 = vsel %vm178, 1, 0
    %v181 = vsel %vm179, 1, 0
    %v182 = vcvt.s32.f32 %v180
    %v183 = vcvt.s32.f32 %v181
    %v184 = vadd.f32 %v170, %v182
    %v185 = vadd.f32 %v171, %v183
    %vm186 = vcmask 326656
    %v188 = vsel %vm186, %v184, 0
    %v191 = vsel %vm186, %v185, 0
    %193 = vmatprep.subr.mxu0 0.0
    %194 = vmatpush1.msra.mxu0 %v32
    %195 = vmatprep.subr.mxu0 0.0
    %196 = vmatpush1.msra.mxu0 %v33
    %197 = vmatprep.subr.mxu0 0.0
    %198 = vmatpush1.msra.mxu0 %v34
    %199 = vmatprep.subr.mxu0 0.0
    %200 = vmatpush1.msra.mxu0 %v35
    %201 = vmatprep.subr.mxu0 0.0
    %202 = vmatpush1.msra.mxu0 %v36
    %203 = vmatprep.subr.mxu0 0.0
    %204 = vmatpush1.msra.mxu0 0.0
    %205 = vmatprep.subr.mxu0 0.0
    %206 = vmatpush1.msra.mxu0 0.0
    %207 = vmatprep.subr.mxu0 0.0
    %208 = vmatpush1.msra.mxu0 0.0
    %209 = vmatprep.subr.mxu0 0.0
    %210 = vmatpush1.msra.mxu0 0.0
    %211 = vmatprep.subr.mxu0 0.0
    %212 = vmatpush1.msra.mxu0 0.0
    %213 = vmatprep.subr.mxu0 0.0
    %214 = vmatpush1.msra.mxu0 0.0
    %215 = vmatprep.subr.mxu0 0.0
    %216 = vmatpush1.msra.mxu0 0.0
    %217 = vmatprep.subr.mxu0 0.0
    %218 = vmatpush1.msra.mxu0 0.0
    %219 = vmatprep.subr.mxu0 0.0
    %220 = vmatpush1.msra.mxu0 0.0
    %221 = vmatprep.subr.mxu0 0.0
    %222 = vmatpush1.msra.mxu0 0.0
    %223 = vmatprep.subr.mxu0 0.0
    %224 = vmatpush1.msra.mxu0 0.0
    %225 = vmatprep.subr.mxu0 0.0
    %226 = vmatpush1.msra.mxu0 0.0
    %227 = vmatprep.subr.mxu0 0.0
    %228 = vmatpush1.msra.mxu0 0.0
    %229 = vmatprep.subr.mxu0 0.0
    %230 = vmatpush1.msra.mxu0 0.0
    %231 = vmatprep.subr.mxu0 0.0
    %232 = vmatpush1.msra.mxu0 0.0
    %233 = vmatprep.subr.mxu0 0.0
    %234 = vmatpush1.msra.mxu0 0.0
    %235 = vmatprep.subr.mxu0 0.0
    %236 = vmatpush1.msra.mxu0 0.0
    %237 = vmatprep.subr.mxu0 0.0
    %238 = vmatpush1.msra.mxu0 0.0
    %239 = vmatprep.subr.mxu0 0.0
    %240 = vmatpush1.msra.mxu0 0.0
    %241 = vmatprep.subr.mxu0 0.0
    %242 = vmatpush1.msra.mxu0 0.0
    %243 = vmatprep.subr.mxu0 0.0
    %244 = vmatpush1.msra.mxu0 0.0
    %245 = vmatprep.subr.mxu0 0.0
    %246 = vmatpush1.msra.mxu0 0.0
    %247 = vmatprep.subr.mxu0 0.0
    %248 = vmatpush1.msra.mxu0 0.0
    %249 = vmatprep.subr.mxu0 0.0
    %250 = vmatpush1.msra.mxu0 0.0
    %251 = vmatprep.subr.mxu0 0.0
    %252 = vmatpush1.msra.mxu0 0.0
    %253 = vmatprep.subr.mxu0 0.0
    %254 = vmatpush1.msra.mxu0 0.0
    %255 = vmatprep.subr.mxu0 0.0
    %256 = vmatpush1.msra.mxu0 0.0
    %257 = vmatprep.mubr.f32.mxu0 0.0
    %258 = vmatmul.mubr.f32.gmra.mrb[0].mxu0 %v188
    %v259 = vpop.f32.mrb[0].mxu0
    %v260 = vadd.f32 0.0, %v259
    %v261 = vpop.f32.mrb[0].mxu0
    %262 = vmatprep.mubr.f32.mxu0 0.0
    %263 = vmatmul.mubr.f32.gmra.mrb[0].mxu0 %v191
    %v264 = vpop.f32.mrb[0].mxu0
    %v265 = vadd.f32 0.0, %v264
    %v266 = vpop.f32.mrb[0].mxu0
    %267 = vdwg.mxu0
    %v268 = vld [vmem:[#allocation2 + $0x20] sm:$0xf]
    %v269 = vld [vmem:[#allocation2 + $0x24] sm:$0xf]
    %v270 = vld [vmem:[#allocation2 + $0x28] sm:$0xf]
    %v271 = vld [vmem:[#allocation2 + $0x2c] sm:$0xf]
    %v272 = vld [vmem:[#allocation2 + $0x30] sm:$0xf]
    %v273 = vld [vmem:[#allocation2 + $0x34] sm:$0xf]
    %v274 = vld [vmem:[#allocation2 + $0x38] sm:$0xf]
    %v275 = vld [vmem:[#allocation2 + $0x3c] sm:$0xf]
    %v276 = vld [vmem:[#allocation2 + $0x40] sm:$0xf]
    %v277 = vld [vmem:[#allocation2 + $0x44] sm:$0xf]
    %v278 = vld [vmem:[#allocation2 + $0x48] sm:$0xf]
    %v279 = vld [vmem:[#allocation2 + $0x4c] sm:$0xf]
    %v280 = vld [vmem:[#allocation2 + $0x50] sm:$0xf]
    %v281 = vld [vmem:[#allocation2 + $0x54] sm:$0xf]
    %v282 = vld [vmem:[#allocation2 + $0x58] sm:$0xf]
    %v283 = vld [vmem:[#allocation2 + $0x5c] sm:$0xf]
    %v284 = vpack.c.bf16 %v265, %v260
    %v285 = vlaneseq
    %v286 = vshrl.u32 %v285, 7
    %v287 = vsub.s32 5, %v286
    %v288 = vrot.slane %v36, %v287
    %v305 = vunpack.c.l.b16 %v268
    %v306 = vunpack.c.l.b16 %v269
    %v307 = vunpack.c.l.b16 %v270
    %v308 = vunpack.c.l.b16 %v271
    %v309 = vunpack.c.l.b16 %v272
    %v310 = vunpack.c.l.b16 %v273
    %v311 = vunpack.c.l.b16 %v274
    %v312 = vunpack.c.l.b16 %v275
    %v313 = vunpack.c.l.b16 %v276
    %v314 = vunpack.c.l.b16 %v277
    %v315 = vunpack.c.l.b16 %v278
    %v316 = vunpack.c.l.b16 %v279
    %v317 = vunpack.c.l.b16 %v280
    %v318 = vunpack.c.l.b16 %v281
    %v319 = vunpack.c.l.b16 %v282
    %v320 = vunpack.c.l.b16 %v283
    %v321 = vpack.c.b16 %v306, %v305
    %v322 = vpack.c.b16 %v308, %v307
    %v323 = vpack.c.b16 %v310, %v309
    %v324 = vpack.c.b16 %v312, %v311
    %v325 = vpack.c.b16 %v314, %v313
    %v326 = vpack.c.b16 %v316, %v315
    %v327 = vpack.c.b16 %v318, %v317
    %v328 = vpack.c.b16 %v320, %v319
    %337 = vmatprep.subr.bf16.mxu0 0
    %338 = vmatpush1.bf16.msra.mxu0 %v321
    %339 = vmatprep.subr.bf16.mxu0 0
    %340 = vmatpush1.bf16.msra.mxu0 %v322
    %341 = vmatprep.subr.bf16.mxu0 0
    %342 = vmatpush1.bf16.msra.mxu0 %v323
    %343 = vmatprep.subr.bf16.mxu0 0
    %344 = vmatpush1.bf16.msra.mxu0 %v324
    %345 = vmatprep.subr.bf16.mxu0 0
    %346 = vmatpush1.bf16.msra.mxu0 %v325
    %347 = vmatprep.subr.bf16.mxu0 0
    %348 = vmatpush1.bf16.msra.mxu0 %v326
    %349 = vmatprep.subr.bf16.mxu0 0
    %350 = vmatpush1.bf16.msra.mxu0 %v327
    %351 = vmatprep.subr.bf16.mxu0 0
    %352 = vmatpush1.bf16.msra.mxu0 %v328
    %353 = vmatprep.subr.bf16.mxu0 0
    %354 = vmatpush1.bf16.msra.mxu0 0
    %355 = vmatprep.subr.bf16.mxu0 0
    %356 = vmatpush1.bf16.msra.mxu0 0
    %357 = vmatprep.subr.bf16.mxu0 0
    %358 = vmatpush1.bf16.msra.mxu0 0
    %359 = vmatprep.subr.bf16.mxu0 0
    %360 = vmatpush1.bf16.msra.mxu0 0
    %361 = vmatprep.subr.bf16.mxu0 0
    %362 = vmatpush1.bf16.msra.mxu0 0
    %363 = vmatprep.subr.bf16.mxu0 0
    %364 = vmatpush1.bf16.msra.mxu0 0
    %365 = vmatprep.subr.bf16.mxu0 0
    %366 = vmatpush1.bf16.msra.mxu0 0
    %367 = vmatprep.subr.bf16.mxu0 0
    %368 = vmatpush1.bf16.msra.mxu0 0
    %369 = vmatprep.mubr.bf16.mxu0 0
    %370 = vmatmul.mubr.bf16.gmra.mrb[0].mxu0 %v284
    %v371 = vpop.f32.mrb[0].mxu0
    %v372 = vadd.f32 %v288, %v371
    %v373 = vpop.f32.mrb[0].mxu0
    %v374 = vpop.f32.mrb[0].mxu0
    %v375 = vadd.f32 %v288, %v374
    %v376 = vpop.f32.mrb[0].mxu0
    %377 = vdwg.mxu0
    %v378 = vadd.f32 %v372, %v154
    %v379 = vadd.f32 %v375, %v155
    %v380 = vtanh.pop %v378
    %v381 = vtanh.pop %v379
    %v382 = vld [vmem:[#allocation2 + $0x60] sm:$0xf]
    %v383 = vld [vmem:[#allocation2 + $0x64] sm:$0xf]
    %v384 = vld [vmem:[#allocation2 + $0x68] sm:$0xf]
    %v385 = vld [vmem:[#allocation2 + $0x6c] sm:$0xf]
    %v386 = vld [vmem:[#allocation2 + $0x70] sm:$0xf]
    %v387 = vld [vmem:[#allocation2 + $0x74] sm:$0xf]
    %v388 = vld [vmem:[#allocation2 + $0x78] sm:$0xf]
    %v389 = vld [vmem:[#allocation2 + $0x7c] sm:$0xf]
    %v390 = vld [vmem:[#allocation2 + $0x80] sm:$0xf]
    %v391 = vld [vmem:[#allocation2 + $0x84] sm:$0xf]
    %v392 = vld [vmem:[#allocation2 + $0x88] sm:$0xf]
    %v393 = vld [vmem:[#allocation2 + $0x8c] sm:$0xf]
    %v394 = vld [vmem:[#allocation2 + $0x90] sm:$0xf]
    %v395 = vld [vmem:[#allocation2 + $0x94] sm:$0xf]
    %v396 = vld [vmem:[#allocation2 + $0x98] sm:$0xf]
    %v397 = vld [vmem:[#allocation2 + $0x9c] sm:$0xf]
    %v398 = vpack.c.bf16 %v381, %v380
    %v415 = vunpack.c.l.b16 %v382
    %v416 = vunpack.c.l.b16 %v383
    %v417 = vunpack.c.l.b16 %v384
    %v418 = vunpack.c.l.b16 %v385
    %v419 = vunpack.c.l.b16 %v386
    %v420 = vunpack.c.l.b16 %v387
    %v421 = vunpack.c.l.b16 %v388
    %v422 = vunpack.c.l.b16 %v389
    %v423 = vunpack.c.l.b16 %v390
    %v424 = vunpack.c.l.b16 %v391
    %v425 = vunpack.c.l.b16 %v392
    %v426 = vunpack.c.l.b16 %v393
    %v427 = vunpack.c.l.b16 %v394
    %v428 = vunpack.c.l.b16 %v395
    %v429 = vunpack.c.l.b16 %v396
    %v430 = vunpack.c.l.b16 %v397
    %v431 = vpack.c.b16 %v416, %v415
    %v432 = vpack.c.b16 %v418, %v417
    %v433 = vpack.c.b16 %v420, %v419
    %v434 = vpack.c.b16 %v422, %v421
    %v435 = vpack.c.b16 %v424, %v423
    %v436 = vpack.c.b16 %v426, %v425
    %v437 = vpack.c.b16 %v428, %v427
    %v438 = vpack.c.b16 %v430, %v429
    %447 = vmatprep.subr.bf16.mxu0 0
    %448 = vmatpush1.bf16.msra.mxu0 %v431
    %449 = vmatprep.subr.bf16.mxu0 0
    %450 = vmatpush1.bf16.msra.mxu0 %v432
    %451 = vmatprep.subr.bf16.mxu0 0
    %452 = vmatpush1.bf16.msra.mxu0 %v433
    %453 = vmatprep.subr.bf16.mxu0 0
    %454 = vmatpush1.bf16.msra.mxu0 %v434
    %455 = vmatprep.subr.bf16.mxu0 0
    %456 = vmatpush1.bf16.msra.mxu0 %v435
    %457 = vmatprep.subr.bf16.mxu0 0
    %458 = vmatpush1.bf16.msra.mxu0 %v436
    %459 = vmatprep.subr.bf16.mxu0 0
    %460 = vmatpush1.bf16.msra.mxu0 %v437
    %461 = vmatprep.subr.bf16.mxu0 0
    %462 = vmatpush1.bf16.msra.mxu0 %v438
    %463 = vmatprep.subr.bf16.mxu0 0
    %464 = vmatpush1.bf16.msra.mxu0 0
    %465 = vmatprep.subr.bf16.mxu0 0
    %466 = vmatpush1.bf16.msra.mxu0 0
    %467 = vmatprep.subr.bf16.mxu0 0
    %468 = vmatpush1.bf16.msra.mxu0 0
    %469 = vmatprep.subr.bf16.mxu0 0
    %470 = vmatpush1.bf16.msra.mxu0 0
    %471 = vmatprep.subr.bf16.mxu0 0
    %472 = vmatpush1.bf16.msra.mxu0 0
    %473 = vmatprep.subr.bf16.mxu0 0
    %474 = vmatpush1.bf16.msra.mxu0 0
    %475 = vmatprep.subr.bf16.mxu0 0
    %476 = vmatpush1.bf16.msra.mxu0 0
    %477 = vmatprep.subr.bf16.mxu0 0
    %478 = vmatpush1.bf16.msra.mxu0 0
    %479 = vmatprep.mubr.bf16.mxu0 0
    %480 = vmatmul.mubr.bf16.gmra.mrb[0].mxu0 %v398
    %v481 = vpop.f32.mrb[0].mxu0
    %v482 = vadd.f32 0.0, %v481
    %v483 = vpop.f32.mrb[0].mxu0
    %v484 = vpop.f32.mrb[0].mxu0
    %v485 = vadd.f32 0.0, %v484
    %v486 = vpop.f32.mrb[0].mxu0
    %487 = vdwg.mxu0
    %v488 = vlaneseq
    %v489 = vshrl.u32 %v488, 7
    %v490 = vsub.s32 6, %v489
    %v491 = vrot.slane %v36, %v490
    %v492 = vadd.f32 %v482, %v491
    %v493 = vadd.f32 %v485, %v491
    %v494 = vtanh.pop %v492
    %v495 = vtanh.pop %v493
    %496 = vst.msk [vmem:[%s4] sm:$0xff] %vm79, %v494
    %497 = vst.msk [vmem:[%s4 + $0x8] sm:$0xff] %vm79, %v495
    // Predicated region
    $region22: #{cosyvoice_tts_forward.1} parent=1 // pred_check
      _
    $region23: #{cosyvoice_tts_forward.1} parent=1 // pred_check_branch
      %499 = sbr.rel (0) target = $region25
    $region24: #{cosyvoice_tts_forward.1} parent=1 // pred_region
      _
    $region25: #{cosyvoice_tts_forward.1} parent=1 // pred_fallthru
      _
    // Predicated region
    $region26: #{cosyvoice_tts_forward.1} parent=1 // pred_check
      _
    $region27: #{cosyvoice_tts_forward.1} parent=1 // pred_check_branch
      %501 = sbr.rel (0) target = $region29
    $region28: #{cosyvoice_tts_forward.1} parent=1 // pred_region
      _
    $region29: #{cosyvoice_tts_forward.1} parent=1 // pred_fallthru
      _
    %502 = vsyncpa [#allocation3], 1

</llo_original>
